<compile_context>
chip_gen: v7x
topology: tpu7x:2x2x1
jax: 0.10.0
libtpu: 0.0.40
codegen_flags: <defaults>
</compile_context>

<pallas_src>
import functools
import math

import jax
import jax.numpy as jnp
from jax import lax
from jax.experimental import pallas as pl
from jax.experimental.pallas import tpu as pltpu

_LANES = 128
_SUBLANES = 8


def _lcm(a: int, b: int) -> int:
    return a * b // math.gcd(a, b)


# --------------------------------------------------------------------------
# Kernel 1: softmax over the logit pattern (runs once, O(pattern) work).
# --------------------------------------------------------------------------
def _softmax_pattern_kernel(temp_ref, logits_ref, probs_ref, *, copies: int):
    # temp_ref:   SMEM (1, 1) f32 -- temperature
    # logits_ref: VMEM (P, W) f32 -- pattern holding `copies` identical copies
    #                                of every entity logit
    # probs_ref:  VMEM (P, W) f32 -- softmax probabilities (same pattern layout)
    inv_t = 1.0 / jnp.abs(temp_ref[0, 0])
    scaled = logits_ref[...] * inv_t
    m = jnp.max(scaled, axis=-1, keepdims=True)
    m = jnp.max(m, axis=0, keepdims=True)                       # (1, 1) global max
    e = jnp.exp(scaled - m)
    s = jnp.sum(jnp.sum(e, axis=-1, keepdims=True), axis=0, keepdims=True)
    # Every entity appears `copies` times in the pattern, so the true softmax
    # denominator is s / copies  ->  probs = e * copies / s.
    probs_ref[...] = e * (float(copies) / s)


# --------------------------------------------------------------------------
# Kernel 2: store-bound broadcast of the pattern into the output.
# --------------------------------------------------------------------------
def _fill_kernel(src_ref, out_ref, *, chunk_rows: int, block_rows: int):
    """Fill the (block_rows, W) output tile by repeating a small source.

    src_ref is either (chunk_rows, W) -- a pre-tiled lane-dense chunk -- or
    (1, W) -- a single probability row to broadcast down the sublanes.
    The fill is a fori_loop over chunk-sized stores (not a fully unrolled
    multi-MiB broadcast), so instruction count stays small and the vst work
    hides under the previous tile's HBM writeback DMA.
    """
    src = src_ref[...]
    if src.shape[0] != chunk_rows:  # row path: broadcast the single prob row
        src = jnp.broadcast_to(src, (chunk_rows, src.shape[1]))
    chunk = src.astype(out_ref.dtype)

    n_chunks = block_rows // chunk_rows
    if n_chunks == 1:
        out_ref[...] = chunk
    else:
        def body(i, carry):
            start = i * chunk_rows
            if chunk_rows % _SUBLANES == 0:
                start = pl.multiple_of(start, _SUBLANES)  # aligned, unmasked stores
            out_ref[pl.ds(start, chunk_rows), :] = chunk
            return carry

        lax.fori_loop(0, n_chunks, body, 0)


def _choose_tiling(rows_total: int, row_bytes: int, unit: int,
                   chunk_target_bytes: int, tile_target_bytes: int):
    """Pick (chunk_rows, block_rows).

    chunk_rows divides block_rows and is a multiple of `unit` (8-sublane and
    pattern-phase aligned); block ~= tile_target_bytes; and whenever the output
    is big enough the grid gets >= 2 steps so both v7x TensorCores get stores.
    """
    chunk_rows = unit * max(1, chunk_target_bytes // (unit * row_bytes))
    block_rows = chunk_rows * max(1, tile_target_bytes // (chunk_rows * row_bytes))
    if block_rows >= rows_total:
        if rows_total >= 2 * chunk_rows:
            # Split rather than using a single full-size block (v7x 2-TC sharding).
            block_rows = chunk_rows * ((rows_total + 2 * chunk_rows - 1) // (2 * chunk_rows))
        else:
            # Tiny output: single block equal to the full dim.  Legal even when
            # not a multiple of 8 ("block equals full array dim" rule).
            block_rows = rows_total
            chunk_rows = rows_total
    return chunk_rows, block_rows


def prior_forward(
    batch_size: int,
    logits: jax.Array,
    temperature: jax.Array,
    *,
    alpha: float = 1.0,
    out_dtype=jnp.float32,
    target_tile_bytes: int = 8 * 1024 * 1024,     # >= 4 MiB keeps v5e near roofline
    chunk_target_bytes: int = 128 * 1024,
    max_pattern_bytes: int = 2 * 1024 * 1024,
    max_cols_per_tile: int = 16 * 1024,
) -> jax.Array:
    """Pallas equivalent of Prior.forward(batch_size) -> (batch_size, n_entities)."""
    n_entities = int(logits.shape[0])
    if bool(alpha):
        base = jnp.asarray(logits, jnp.float32)
    else:
        base = jnp.ones((n_entities,), jnp.float32)          # uniform_logits buffer
    base_row = base.reshape(1, n_entities)
    temp_2d = jnp.asarray(temperature, jnp.float32).reshape(1, 1)
    out_itemsize = jnp.dtype(out_dtype).itemsize

    total = batch_size * n_entities
    g = math.gcd(n_entities, _LANES)
    copies = _LANES // g                  # logit copies per lane-dense pattern
    flat_pattern_rows = n_entities // g   # lcm(N, 128) // 128
    flat_pattern_bytes = flat_pattern_rows * _LANES * 4

    # Lane-dense flattened path only when the epilogue reshape is free
    # (B*N % 128 == 0  <=>  B % copies == 0) and the pattern is small.
    use_flat = (total % _LANES == 0) and (flat_pattern_bytes <= max_pattern_bytes)

    if use_flat:
        pattern_rows = flat_pattern_rows
        if copies > 1:
            pattern_logits = jnp.tile(base_row, (1, copies)).reshape(pattern_rows, _LANES)
        else:
            pattern_logits = base_row.reshape(pattern_rows, _LANES)
        softmax_copies = copies
    else:
        pattern_rows = 1
        pattern_logits = base_row
        softmax_copies = 1

    # ---- Kernel 1: probabilities (O(pattern) work, done once) --------------
    pattern_probs = pl.pallas_call(
        functools.partial(_softmax_pattern_kernel, copies=softmax_copies),
        out_shape=jax.ShapeDtypeStruct(pattern_logits.shape, jnp.float32),
        in_specs=[
            pl.BlockSpec(memory_space=pltpu.MemorySpace.SMEM),   # temperature scalar
            pl.BlockSpec(memory_space=pltpu.MemorySpace.VMEM),   # pattern logits
        ],
        out_specs=pl.BlockSpec(memory_space=pltpu.MemorySpace.VMEM),
        cost_estimate=pl.CostEstimate(
            flops=6 * pattern_logits.size,
            transcendentals=pattern_logits.size,
            bytes_accessed=8 * pattern_logits.size + 4,
        ),
    )(temp_2d, pattern_logits)
    # (Callers that can consume a broadcast should stop here and use
    #  pattern_probs directly instead of materializing the repeat.)

    if use_flat:
        # ---- Kernel 2a: flattened lane-dense store ----------------------------
        rows_out = total // _LANES
        row_bytes = _LANES * out_itemsize
        unit = _lcm(pattern_rows, _SUBLANES)   # phase- and sublane-aligned granule
        chunk_rows, block_rows = _choose_tiling(
            rows_out, row_bytes, unit, chunk_target_bytes, target_tile_bytes)

        # Build the chunk source once in the wrapper (tiny, <= ~256 KiB).
        if chunk_rows != pattern_rows:
            chunk_src = jnp.tile(pattern_probs, (chunk_rows // pattern_rows, 1))
        else:
            chunk_src = pattern_probs

        num_tiles = pl.cdiv(rows_out, block_rows)
        block_bytes = block_rows * row_bytes
        src_bytes = chunk_rows * _LANES * 4
        vmem_limit = min(2 * block_bytes + 3 * src_bytes + (2 << 20), 100 * 1024 * 1024)
        vmem_limit = max(vmem_limit, 8 * 1024 * 1024)

        out_flat = pl.pallas_call(
            functools.partial(_fill_kernel, chunk_rows=chunk_rows, block_rows=block_rows),
            out_shape=jax.ShapeDtypeStruct((rows_out, _LANES), out_dtype),
            grid=(num_tiles,),
            in_specs=[pl.BlockSpec((chunk_rows, _LANES), lambda i: (0, 0))],   # resident
            out_specs=pl.BlockSpec((block_rows, _LANES), lambda i: (i, 0)),
            compiler_params=pltpu.CompilerParams(
                dimension_semantics=("parallel",),        # shard stores across v7x TCs
                vmem_limit_bytes=int(vmem_limit),
            ),
            cost_estimate=pl.CostEstimate(
                flops=0,
                transcendentals=0,
                bytes_accessed=rows_out * row_bytes + src_bytes,
            ),
        )(chunk_src)

        # Free epilogue: rows_out * 128 == batch_size * n_entities, so this
        # row-major reshape is layout metadata only -- no slice copy.
        return out_flat.reshape(batch_size, n_entities)

    # ---- Kernel 2b: (B, N) fallback (tail / huge-N cases) ----------------------
    # Lane-dense iff N % 128 == 0; otherwise only the last vreg per row is a
    # masked partial store.
    if n_entities <= max_cols_per_tile:
        tn = n_entities                                    # full last dim (always legal)
    else:
        tn = max_cols_per_tile - (max_cols_per_tile % _LANES)
    row_bytes = tn * out_itemsize
    chunk_rows, block_rows = _choose_tiling(
        batch_size, row_bytes, _SUBLANES, chunk_target_bytes, target_tile_bytes)

    num_row_tiles = pl.cdiv(batch_size, block_rows)
    num_col_tiles = pl.cdiv(n_entities, tn)
    block_bytes = block_rows * row_bytes
    chunk_bytes = chunk_rows * row_bytes
    src_bytes = tn * 4
    vmem_limit = min(2 * block_bytes + 2 * src_bytes + chunk_bytes + (2 << 20),
                     100 * 1024 * 1024)
    vmem_limit = max(vmem_limit, 8 * 1024 * 1024)

    return pl.pallas_call(
        functools.partial(_fill_kernel, chunk_rows=chunk_rows, block_rows=block_rows),
        out_shape=jax.ShapeDtypeStruct((batch_size, n_entities), out_dtype),
        grid=(num_row_tiles, num_col_tiles),
        in_specs=[pl.BlockSpec((1, tn), lambda i, j: (0, j))],
        out_specs=pl.BlockSpec((block_rows, tn), lambda i, j: (i, j)),
        compiler_params=pltpu.CompilerParams(
            dimension_semantics=("parallel", "parallel"),
            vmem_limit_bytes=int(vmem_limit),
        ),
        cost_estimate=pl.CostEstimate(
            flops=0,
            transcendentals=0,
            bytes_accessed=batch_size * n_entities * out_itemsize + n_entities * 4,
        ),
    )(pattern_probs)


if __name__ == "__main__":
    key = jax.random.PRNGKey(0)
    k1, k2, k3 = jax.random.split(key, 3)

    def reference(batch_size, logits, temperature):
        p = jax.nn.softmax(logits / jnp.abs(temperature), axis=0)
        return jnp.broadcast_to(p[None, :], (batch_size, logits.shape[0]))

    temperature = jnp.array(1.0, dtype=jnp.float32)

    # Case 1: module-like small shapes (N=32, B=2) -> (B, N) fallback path
    # (B*N % 128 != 0, so no lossy repack / no hidden slice copy).
    n1, b1 = 32, 2
    raw1 = jax.random.uniform(k1, (n1,), jnp.float32, minval=0.0, maxval=100.0)
    logits1 = jnp.log(raw1 + 1e-10)
    out1 = jax.block_until_ready(prior_forward(b1, logits1, temperature))
    assert out1.shape == (b1, n1) and out1.dtype == jnp.float32
    assert jnp.allclose(out1, reference(b1, logits1, temperature), atol=1e-6, rtol=1e-6)

    # Case 2: awkward N=48 (128 % 48 != 0) with B=16 -> generalized lane-dense
    # flattened path (lcm pattern, free reshape epilogue).
    n2, b2 = 48, 16
    raw2 = jax.random.uniform(k2, (n2,), jnp.float32, minval=0.0, maxval=100.0)
    logits2 = jnp.log(raw2 + 1e-10)
    out2 = jax.block_until_ready(prior_forward(b2, logits2, temperature))
    assert out2.shape == (b2, n2)
    assert jnp.allclose(out2, reference(b2, logits2, temperature), atol=1e-6, rtol=1e-6)

    # Case 3: lane-aligned N=256, B=500 -> multi-tile grid with a partial last
    # block and a multi-chunk fori_loop fill (small tile target to force it).
    n3, b3 = 256, 500
    raw3 = jax.random.uniform(k3, (n3,), jnp.float32, minval=0.0, maxval=100.0)
    logits3 = jnp.log(raw3 + 1e-10)
    out3 = jax.block_until_ready(
        prior_forward(b3, logits3, temperature, target_tile_bytes=256 * 1024)
    )
    assert out3.shape == (b3, n3)
    assert jnp.allclose(out3, reference(b3, logits3, temperature), atol=1e-6, rtol=1e-6)

    # Case 4: alpha == 0 -> uniform prior (uses the uniform_logits buffer path).
    out4 = jax.block_until_ready(prior_forward(b1, logits1, temperature, alpha=0.0))
    assert jnp.allclose(out4, jnp.full((b1, n1), 1.0 / n1, jnp.float32), atol=1e-6)

    print("KERNEL_OK")
</pallas_src>

<mosaic_0001>
module attributes {stable_mosaic.version = 11 : i64} {
  func.func @_softmax_pattern_kernel(%arg0: memref<1x1xf32, #tpu.memory_space<smem>>, %arg1: memref<1x32xf32, #tpu.memory_space<vmem>>, %arg2: memref<1x32xf32, #tpu.memory_space<vmem>>) attributes {dimension_semantics = [], scalar_prefetch = 0 : i64, scratch_operands = 0 : i64, tpu.core_type = #tpu.core_type<tc>} {
    %c0 = arith.constant 0 : index
    %c0_0 = arith.constant 0 : index
    %0 = memref.load %arg0[%c0, %c0_0] : memref<1x1xf32, #tpu.memory_space<smem>>
    %1 = math.absf %0 : f32
    %cst = arith.constant 1.000000e+00 : f32
    %2 = arith.divf %cst, %1 : f32
    %c0_1 = arith.constant 0 : index
    %c0_2 = arith.constant 0 : index
    %3 = vector.load %arg1[%c0_1, %c0_2] : memref<1x32xf32, #tpu.memory_space<vmem>>, vector<1x32xf32>
    %4 = vector.broadcast %2 : f32 to vector<1x32xf32>
    %5 = arith.mulf %3, %4 : vector<1x32xf32>
    %cst_3 = arith.constant dense<0xFF800000> : vector<1xf32>
    %6 = vector.multi_reduction <maximumf>, %5, %cst_3 [1] : vector<1x32xf32> to vector<1xf32>
    %7 = vector.shape_cast %6 : vector<1xf32> to vector<1x1xf32>
    %cst_4 = arith.constant dense<0xFF800000> : vector<1xf32>
    %8 = vector.multi_reduction <maximumf>, %7, %cst_4 [0] : vector<1x1xf32> to vector<1xf32>
    %9 = vector.shape_cast %8 : vector<1xf32> to vector<1x1xf32>
    %10 = vector.broadcast %9 : vector<1x1xf32> to vector<1x32xf32>
    %11 = arith.subf %5, %10 : vector<1x32xf32>
    %12 = math.exp %11 : vector<1x32xf32>
    %cst_5 = arith.constant dense<0.000000e+00> : vector<1xf32>
    %13 = vector.multi_reduction <add>, %12, %cst_5 [1] : vector<1x32xf32> to vector<1xf32>
    %14 = vector.shape_cast %13 : vector<1xf32> to vector<1x1xf32>
    %cst_6 = arith.constant dense<0.000000e+00> : vector<1xf32>
    %15 = vector.multi_reduction <add>, %14, %cst_6 [0] : vector<1x1xf32> to vector<1xf32>
    %16 = vector.shape_cast %15 : vector<1xf32> to vector<1x1xf32>
    %cst_7 = arith.constant 1.000000e+00 : f32
    %17 = vector.broadcast %cst_7 : f32 to vector<1x1xf32>
    %18 = arith.divf %17, %16 : vector<1x1xf32>
    %19 = vector.broadcast %18 : vector<1x1xf32> to vector<1x32xf32>
    %20 = arith.mulf %12, %19 : vector<1x32xf32>
    %c0_8 = arith.constant 0 : index
    %c0_9 = arith.constant 0 : index
    %21 = vector.load %arg2[%c0_8, %c0_9] : memref<1x32xf32, #tpu.memory_space<vmem>>, vector<1x32xf32>
    tpu.vector_store %arg2[%c0_8, %c0_9], %20 {strides = array<i32>} : memref<1x32xf32, #tpu.memory_space<vmem>>, vector<1x32xf32>,
    return
  }
}

</mosaic_0001>

<llo_original>
// kernel: tpu_custom_call.1
$region0: #{tpu_custom_call.1}
  #allocation0 [shape = 'u32[]', space=smem, size = 0x4, offset = 0x4, fixed_abs, tag = 'smem constant byte address 0x4 - core index']
  #allocation1 [shape = 'u32[144,128]{1,0:T(1,128)}', space=vmem, size = 0x12000, scoped, tag = 'internal scratch']
  #allocation2 [shape = 'f32[1,1]{1,0:T(1,128)S(6)}', space=smem, size = 0x200, scoped, tag = 'scoped memory for tpu_custom_call.1']
  %s0 = inlined_call_operand.<no memory space> [shape: f32[1,1], index: 0, kind: input, shape index: {}]
  %s1 = inlined_call_operand.vmem [shape: f32[1,32], index: 1, kind: input, shape index: {}]
  %s2 = inlined_call_operand.hbm [shape: f32[1,32], index: 2, kind: output, shape index: {}]
  %s3 = sld [smem:[#allocation0]]
  $region18: #{tpu_custom_call.1} parent=0
    _
  %s5 = ssub.s32 1, %s3
  %s6 = scalar_select 0, %s5, %s3
  %7 = sst [smem:[#allocation2]] %s0
  $region1: #{tpu_custom_call.1} parent=0
    #allocation3 [shape = 'u8[512]{0}', space=vmem, size = 0x400, scoped, tag = 'output window, operand 0, single buffered']
    #allocation4 [shape = 's32[1]{0}', space=sflag, size = 0x4, scoped, tag = 'scoped memory for tpu_custom_call.1']
    %8 = vsyncpa [#allocation4], 0
    // Predicated region
    $region2: #{tpu_custom_call.1} parent=1 // pred_check
      _
    $region3: #{tpu_custom_call.1} parent=1 // pred_check_branch
      %10 = sbr.rel (0) target = $region5
    $region4: #{tpu_custom_call.1} parent=1 // pred_region
      _
    $region5: #{tpu_custom_call.1} parent=1 // pred_fallthru
      _
    // Predicated region
    $region6: #{tpu_custom_call.1} parent=1 // pred_check
      _
    $region7: #{tpu_custom_call.1} parent=1 // pred_check_branch
      %12 = sbr.rel (0) target = $region9
    $region8: #{tpu_custom_call.1} parent=1 // pred_region
      _
    $region9: #{tpu_custom_call.1} parent=1 // pred_fallthru
      _
    %s13 = sld [smem:[#allocation2]]
    %s14 = sand.u32 2147483647, %s13
    %v15 = vstv %s14
    %v16 = vrcp.pop %v15
    %s17 = vtos %v16
    %v18 = vld [vmem:[%s1] sm:$0x1]
    %v19 = vstv %s17
    %v20 = vmul.f32 %v18, %v19
    %vm21 = vcmask 253952
    %v22 = vsel %vm21, %v20, -inf
    %23 = vmax.xlane.f32.xlu0 %v22
    %v24 = vpop.xlane.xlu0 %23
    %v25 = vsub.f32 %v20, %v24
    %v26 = vmul.f32 %v25, 1.442695
    %v27 = vpow.pop %v26
    %v28 = vsel %vm21, %v27, 0.0
    %29 = vadd.xlane.f32.xlu0 %v28
    %v30 = vpop.xlane.xlu0 %29
    %v31 = vadd.f32 %v30, 0.0
    %v32 = vrcp.pop %v31
    %v33 = vmul.f32 1.0, %v32
    %v34 = vmul.f32 %v27, %v33
    %35 = vst.msk [vmem:[#allocation3] sm:$0x1] %vm21, %v34
    // Predicated region
    $region10: #{tpu_custom_call.1} parent=1 // pred_check
      _
    $region11: #{tpu_custom_call.1} parent=1 // pred_check_branch
      %37 = sbr.rel (0) target = $region13
    $region12: #{tpu_custom_call.1} parent=1 // pred_region
      %s39 = ssub.s32 16, 16
      %40 = vsyncadd [#allocation4], %s39
      %s42 = sshll.u32 [#allocation3], 4
      %s43 = int_to_ptr.vmem [resolvable:$true] %s42
      %45 = dma.vmem_to_hbm [thread:$0]  %s43, 16, %s2, [#allocation4]
    $region13: #{tpu_custom_call.1} parent=1 // pred_fallthru
      _
    // Predicated region
    $region14: #{tpu_custom_call.1} parent=1 // pred_check
      _
    $region15: #{tpu_custom_call.1} parent=1 // pred_check_branch
      %47 = sbr.rel (0) target = $region17
    $region16: #{tpu_custom_call.1} parent=1 // pred_region
      %48 = dma.done [#allocation4], 16
    $region17: #{tpu_custom_call.1} parent=1 // pred_fallthru
      _
    %49 = vsyncpa [#allocation4], 1

</llo_original>
